<compile_context>
chip_gen: v5e
topology: v5e:2x2
jax: 0.10.0
libtpu: 0.0.40
codegen_flags: <defaults>
</compile_context>

<pallas_src>
import functools

import jax
import jax.numpy as jnp
import numpy as np
from jax.experimental import pallas as pl
from jax.experimental.pallas import tpu as pltpu

NUM_DISTS = 9
NUM_DIMS = 2
NUM_SUPPORT = 3
LABEL_SMOOTH = 0.15
NUM_PARAMS_IN_USE = 4  # use_mean + use_stddev + use_dists + use_support
SUPPORT_WEIGHTS = (0.351, 0.321, 0.328)  # baked into the kernel as scalar constants

MAX_TILE_LANES = 4096  # per-block batch lanes; keeps VMEM residency small on v7x (64 MiB)


def _pick_tile(n, max_lanes=MAX_TILE_LANES):
    """Whole axis if it fits, else the biggest multiple of 128 <= max_lanes dividing n."""
    if n <= max_lanes:
        return n
    t = (max_lanes // 128) * 128
    while t >= 128:
        if n % t == 0:
            return t
        t -= 128
    return n  # fallback: single block over the whole axis (correct, just unpipelined)


def custom_loss_kernel(pred_ref, y_ref, out_ref,
                       acc_ce, acc_sqm, acc_sqs, acc_wnll, acc_sw, loss_acc,
                       *, num_dims, num_dists, eps, inv_batch):
    """Blocks are (1, 14, TILE_B): fields on sublanes, batch samples on lanes.

    Field layout (matches the PyTorch packed-label format):
      [0:K)        class logits / one-hot
      [K]          mean
      [K+1]        stddev
      [K+2:K+5)    support logits / one-hot
    """
    f32 = jnp.float32
    K = num_dists
    d = pl.program_id(0)      # which dimension
    j = pl.program_id(1)      # which batch block
    nb = pl.num_programs(1)
    w0, w1, w2 = SUPPORT_WEIGHTS

    @pl.when(jnp.logical_and(d == 0, j == 0))
    def _():
        loss_acc[...] = jnp.zeros_like(loss_acc)

    @pl.when(j == 0)
    def _():
        acc_ce[...] = jnp.zeros_like(acc_ce)
        acc_sqm[...] = jnp.zeros_like(acc_sqm)
        acc_sqs[...] = jnp.zeros_like(acc_sqs)
        acc_wnll[...] = jnp.zeros_like(acc_wnll)
        acc_sw[...] = jnp.zeros_like(acc_sw)

    # Upcast in-register (bf16 inputs keep DMA narrow; labels should arrive f32).
    pred = pred_ref[0].astype(f32)     # (14, T)
    lab = y_ref[0].astype(f32)         # (14, T)

    cls_logits = pred[:K, :]                              # (K, T)
    mean_pred = pred[K:K + 1, :]                          # (1, T)
    std_pred = pred[K + 1:K + 2, :]                       # (1, T)
    sup_logits = pred[K + 2:K + 2 + NUM_SUPPORT, :]       # (3, T)

    dist_t = lab[:K, :]
    mean_t = lab[K:K + 1, :]
    std_t = lab[K + 1:K + 2, :]
    sup_t = lab[K + 2:K + 2 + NUM_SUPPORT, :]

    # --- classification CE with label smoothing (softmax over the class sublane axis) ---
    m = jnp.max(cls_logits, axis=0, keepdims=True)                      # (1, T)
    shifted = cls_logits - m                                            # (K, T)
    lse = jnp.log(jnp.sum(jnp.exp(shifted), axis=0, keepdims=True))     # (1, T)
    logp = shifted - lse                                                # (K, T)
    # -mean_k logp reuses m/lse: mean_k logp = mean_k logits - (m + lse)
    mean_logits = jnp.sum(cls_logits, axis=0, keepdims=True) * (1.0 / K)
    uniform = (m + lse) - mean_logits                                   # (1, T)

    cidx = jax.lax.broadcasted_iota(jnp.int32, cls_logits.shape, 0)
    cmax = jnp.max(dist_t, axis=0, keepdims=True)
    ctgt = jnp.min(jnp.where(dist_t == cmax, cidx, K), axis=0, keepdims=True)
    conehot = (cidx == ctgt).astype(f32)                                # (K, T)
    nll = -jnp.sum(conehot * logp, axis=0, keepdims=True)               # (1, T)
    ce = (1.0 - eps) * nll + eps * uniform                              # (1, T)

    # --- regression squared errors ---
    sq_mean = (mean_pred - mean_t) ** 2                                 # (1, T)
    sq_std = (std_pred - std_t) ** 2                                    # (1, T)

    # --- support weighted CE ---
    sm = jnp.max(sup_logits, axis=0, keepdims=True)
    sshift = sup_logits - sm
    slse = jnp.log(jnp.sum(jnp.exp(sshift), axis=0, keepdims=True))
    slogp = sshift - slse                                               # (3, T)
    sidx = jax.lax.broadcasted_iota(jnp.int32, sup_logits.shape, 0)
    smax = jnp.max(sup_t, axis=0, keepdims=True)
    stgt = jnp.min(jnp.where(sup_t == smax, sidx, NUM_SUPPORT), axis=0, keepdims=True)
    sonehot = (sidx == stgt).astype(f32)                                # (3, T)
    snll = -jnp.sum(sonehot * slogp, axis=0, keepdims=True)             # (1, T)
    sample_w = (w0 * sonehot[0:1, :] + w1 * sonehot[1:2, :]
                + w2 * sonehot[2:3, :])                                 # (1, T)

    # --- per-lane partial-sum accumulation (no cross-lane reduce in the hot path) ---
    acc_ce[...] += ce
    acc_sqm[...] += sq_mean
    acc_sqs[...] += sq_std
    acc_wnll[...] += sample_w * snll
    acc_sw[...] += sample_w

    # --- per-dim finalize: one lane reduce per quantity, then mean / sqrt / ratio ---
    @pl.when(j == nb - 1)
    def _():
        ce_sum = jnp.sum(acc_ce[...], axis=1, keepdims=True)
        sqm_sum = jnp.sum(acc_sqm[...], axis=1, keepdims=True)
        sqs_sum = jnp.sum(acc_sqs[...], axis=1, keepdims=True)
        wnll_sum = jnp.sum(acc_wnll[...], axis=1, keepdims=True)
        sw_sum = jnp.sum(acc_sw[...], axis=1, keepdims=True)
        contrib = (ce_sum * inv_batch
                   + jnp.sqrt(sqm_sum * inv_batch)
                   + jnp.sqrt(sqs_sum * inv_batch)
                   + wnll_sum / sw_sum)                                 # (1, 1)
        loss_acc[...] += contrib

    @pl.when(jnp.logical_and(d == num_dims - 1, j == nb - 1))
    def _():
        out_ref[...] = loss_acc[...] * (1.0 / (NUM_PARAMS_IN_USE * num_dims))


def custom_loss(pred_cls, pred_mean, pred_std, pred_sup, y,
                num_dims=NUM_DIMS, num_dists=NUM_DISTS):
    """pred_cls: (B, D, K); pred_mean/std: (B, D); pred_sup: (B, D, 3);
    y: (B, D*(K+5)) in the PyTorch module's packed label format."""
    b = pred_cls.shape[0]
    width = num_dists + 5                                   # 14 fields per (sample, dim)

    # Pack the four heads into one slab (2 DMAs per block instead of 5) and lay out
    # lane-dense: (D, 14, B) with batch on the lane axis.  The transpose is a small
    # extra HBM pass; ideally the head matmuls emit this layout (see TODO at top).
    pred_slab = jnp.concatenate(
        [pred_cls, pred_mean[..., None], pred_std[..., None], pred_sup], axis=-1)
    pred_t = jnp.transpose(pred_slab, (1, 2, 0))            # (D, 14, B)
    y_t = jnp.transpose(y.reshape(b, num_dims, width), (1, 2, 0))  # (D, 14, B)

    tile = _pick_tile(b)
    nb = b // tile
    grid = (num_dims, nb)

    kernel = functools.partial(
        custom_loss_kernel, num_dims=num_dims, num_dists=num_dists,
        eps=LABEL_SMOOTH, inv_batch=1.0 / b)

    itemsize = int(jnp.dtype(pred_t.dtype).itemsize)
    bytes_accessed = int((pred_t.size * itemsize)
                         + (y_t.size * int(jnp.dtype(y_t.dtype).itemsize)) + 4)

    in_spec = pl.BlockSpec((1, width, tile), lambda d, j: (d, 0, j))
    out = pl.pallas_call(
        kernel,
        out_shape=jax.ShapeDtypeStruct((1, 1), jnp.float32),
        grid_spec=pltpu.PrefetchScalarGridSpec(
            num_scalar_prefetch=0,
            grid=grid,
            in_specs=[in_spec, in_spec],
            out_specs=pl.BlockSpec((1, 1), lambda d, j: (0, 0)),
            scratch_shapes=[pltpu.VMEM((1, tile), jnp.float32)] * 5
                           + [pltpu.VMEM((1, 1), jnp.float32)],
        ),
        compiler_params=pltpu.CompilerParams(
            dimension_semantics=("arbitrary", "arbitrary"),
            vmem_limit_bytes=32 * 1024 * 1024),
        cost_estimate=pl.CostEstimate(
            flops=int(60 * b * num_dims * width),
            transcendentals=int(b * num_dims * (num_dists + NUM_SUPPORT + 2)
                                + 2 * num_dims),
            bytes_accessed=bytes_accessed),
    )(pred_t, y_t)
    return out[0, 0]


def reference_loss(pred_cls, pred_mean, pred_std, pred_sup, y,
                   num_dims=NUM_DIMS, num_dists=NUM_DISTS, eps=LABEL_SMOOTH):
    """Pure-JAX reference mirroring the PyTorch forward."""
    block = num_dists + 5
    w = jnp.asarray(SUPPORT_WEIGHTS, dtype=jnp.float32)
    loss = 0.0
    for d in range(num_dims):
        base = d * block
        dist_t = y[:, base:base + num_dists]
        mean_t = y[:, base + num_dists:base + num_dists + 1]
        std_t = y[:, base + num_dists + 1:base + num_dists + 2]
        sup_t = y[:, base + num_dists + 2:base + block]

        logp = jax.nn.log_softmax(pred_cls[:, d, :], axis=-1)
        tgt = jnp.argmax(dist_t, axis=-1)
        nll = -jnp.take_along_axis(logp, tgt[:, None], axis=-1)[:, 0]
        loss += jnp.mean((1 - eps) * nll + eps * (-jnp.mean(logp, axis=-1)))

        loss += jnp.sqrt(jnp.mean((pred_mean[:, d:d + 1] - mean_t) ** 2))
        loss += jnp.sqrt(jnp.mean((pred_std[:, d:d + 1] - std_t) ** 2))

        slogp = jax.nn.log_softmax(pred_sup[:, d, :], axis=-1)
        stgt = jnp.argmax(sup_t, axis=-1)
        snll = -jnp.take_along_axis(slogp, stgt[:, None], axis=-1)[:, 0]
        sw = w[stgt]
        loss += jnp.sum(sw * snll) / jnp.sum(sw)
    return loss / (NUM_PARAMS_IN_USE * num_dims)


if __name__ == "__main__":
    B = 8
    key = jax.random.PRNGKey(0)
    k_cls, k_mean, k_std, k_sup, k_ct, k_mt, k_st, k_stt = jax.random.split(key, 8)

    # predictions
    pred_cls = jax.random.normal(k_cls, (B, NUM_DIMS, NUM_DISTS), dtype=jnp.float32)
    pred_mean = jax.random.normal(k_mean, (B, NUM_DIMS), dtype=jnp.float32)
    pred_std = jnp.abs(jax.random.normal(k_std, (B, NUM_DIMS), dtype=jnp.float32))
    pred_sup = jax.random.normal(k_sup, (B, NUM_DIMS, NUM_SUPPORT), dtype=jnp.float32)

    # ground-truth labels in the packed format: per dim [onehot(9), mean, stddev, onehot(3)]
    cls_idx = jax.random.randint(k_ct, (B, NUM_DIMS), 0, NUM_DISTS)
    sup_idx = jax.random.randint(k_stt, (B, NUM_DIMS), 0, NUM_SUPPORT)
    mean_gt = jax.random.normal(k_mt, (B, NUM_DIMS), dtype=jnp.float32)
    std_gt = jnp.abs(jax.random.normal(k_st, (B, NUM_DIMS), dtype=jnp.float32))

    blocks = []
    for d in range(NUM_DIMS):
        dist_oh = jax.nn.one_hot(cls_idx[:, d], NUM_DISTS, dtype=jnp.float32)
        sup_oh = jax.nn.one_hot(sup_idx[:, d], NUM_SUPPORT, dtype=jnp.float32)
        blocks.append(jnp.concatenate(
            [dist_oh, mean_gt[:, d:d + 1], std_gt[:, d:d + 1], sup_oh], axis=1))
    y = jnp.concatenate(blocks, axis=1)  # (B, NUM_DIMS * 14)

    out = custom_loss(pred_cls, pred_mean, pred_std, pred_sup, y)
    out = jax.block_until_ready(out)

    ref = jax.block_until_ready(
        reference_loss(pred_cls, pred_mean, pred_std, pred_sup, y))
    np.testing.assert_allclose(np.asarray(out), np.asarray(ref), rtol=1e-4, atol=1e-5)

    print("KERNEL_OK")
</pallas_src>

<mosaic_0001>
module attributes {stable_mosaic.version = 11 : i64} {
  func.func @custom_loss_kernel(%arg0: i32, %arg1: i32, %arg2: memref<1x14x8xf32, #tpu.memory_space<vmem>>, %arg3: memref<1x14x8xf32, #tpu.memory_space<vmem>>, %arg4: memref<1x1xf32, #tpu.memory_space<vmem>>, %arg5: memref<1x8xf32, #tpu.memory_space<vmem>>, %arg6: memref<1x8xf32, #tpu.memory_space<vmem>>, %arg7: memref<1x8xf32, #tpu.memory_space<vmem>>, %arg8: memref<1x8xf32, #tpu.memory_space<vmem>>, %arg9: memref<1x8xf32, #tpu.memory_space<vmem>>, %arg10: memref<1x1xf32, #tpu.memory_space<vmem>>) attributes {dimension_semantics = [#tpu.dimension_semantics<arbitrary>, #tpu.dimension_semantics<arbitrary>], iteration_bounds = array<i64: 2, 1>, scalar_prefetch = 0 : i64, scratch_operands = 6 : i64, tpu.core_type = #tpu.core_type<tc>, window_params = [{transform_indices = @transform_0, window_bounds = array<i64: 1, 14, 8>}, {transform_indices = @transform_1, window_bounds = array<i64: 1, 14, 8>}, {pipeline_mode = #tpu.pipeline_mode<synchronous>, transform_indices = @transform_2, window_bounds = array<i64: 1, 1>}]} {
    %c0_i32 = arith.constant 0 : i32
    %0 = arith.cmpi eq, %arg0, %c0_i32 : i32
    %c0_i32_0 = arith.constant 0 : i32
    %1 = arith.cmpi eq, %arg1, %c0_i32_0 : i32
    %2 = arith.andi %0, %1 : i1
    %3 = arith.extui %2 : i1 to i32
    %c0_i32_1 = arith.constant 0 : i32
    %4 = arith.cmpi ne, %3, %c0_i32_1 : i32
    scf.if %4 {
      %cst_51 = arith.constant 0.000000e+00 : f32
      %126 = vector.broadcast %cst_51 : f32 to vector<1x1xf32>
      %c0_52 = arith.constant 0 : index
      %c0_53 = arith.constant 0 : index
      %127 = vector.load %arg10[%c0_52, %c0_53] : memref<1x1xf32, #tpu.memory_space<vmem>>, vector<1x1xf32>
      tpu.vector_store %arg10[%c0_52, %c0_53], %126 {strides = array<i32>} : memref<1x1xf32, #tpu.memory_space<vmem>>, vector<1x1xf32>,
    } else {
    }
    %c0_i32_2 = arith.constant 0 : i32
    %5 = arith.cmpi eq, %arg1, %c0_i32_2 : i32
    %6 = arith.extui %5 : i1 to i32
    %c0_i32_3 = arith.constant 0 : i32
    %7 = arith.cmpi ne, %6, %c0_i32_3 : i32
    scf.if %7 {
      %cst_51 = arith.constant 0.000000e+00 : f32
      %126 = vector.broadcast %cst_51 : f32 to vector<1x8xf32>
      %c0_52 = arith.constant 0 : index
      %c0_53 = arith.constant 0 : index
      %127 = vector.load %arg5[%c0_52, %c0_53] : memref<1x8xf32, #tpu.memory_space<vmem>>, vector<1x8xf32>
      tpu.vector_store %arg5[%c0_52, %c0_53], %126 {strides = array<i32>} : memref<1x8xf32, #tpu.memory_space<vmem>>, vector<1x8xf32>,
      %cst_54 = arith.constant 0.000000e+00 : f32
      %128 = vector.broadcast %cst_54 : f32 to vector<1x8xf32>
      %c0_55 = arith.constant 0 : index
      %c0_56 = arith.constant 0 : index
      %129 = vector.load %arg6[%c0_55, %c0_56] : memref<1x8xf32, #tpu.memory_space<vmem>>, vector<1x8xf32>
      tpu.vector_store %arg6[%c0_55, %c0_56], %128 {strides = array<i32>} : memref<1x8xf32, #tpu.memory_space<vmem>>, vector<1x8xf32>,
      %cst_57 = arith.constant 0.000000e+00 : f32
      %130 = vector.broadcast %cst_57 : f32 to vector<1x8xf32>
      %c0_58 = arith.constant 0 : index
      %c0_59 = arith.constant 0 : index
      %131 = vector.load %arg7[%c0_58, %c0_59] : memref<1x8xf32, #tpu.memory_space<vmem>>, vector<1x8xf32>
      tpu.vector_store %arg7[%c0_58, %c0_59], %130 {strides = array<i32>} : memref<1x8xf32, #tpu.memory_space<vmem>>, vector<1x8xf32>,
      %cst_60 = arith.constant 0.000000e+00 : f32
      %132 = vector.broadcast %cst_60 : f32 to vector<1x8xf32>
      %c0_61 = arith.constant 0 : index
      %c0_62 = arith.constant 0 : index
      %133 = vector.load %arg8[%c0_61, %c0_62] : memref<1x8xf32, #tpu.memory_space<vmem>>, vector<1x8xf32>
      tpu.vector_store %arg8[%c0_61, %c0_62], %132 {strides = array<i32>} : memref<1x8xf32, #tpu.memory_space<vmem>>, vector<1x8xf32>,
      %cst_63 = arith.constant 0.000000e+00 : f32
      %134 = vector.broadcast %cst_63 : f32 to vector<1x8xf32>
      %c0_64 = arith.constant 0 : index
      %c0_65 = arith.constant 0 : index
      %135 = vector.load %arg9[%c0_64, %c0_65] : memref<1x8xf32, #tpu.memory_space<vmem>>, vector<1x8xf32>
      tpu.vector_store %arg9[%c0_64, %c0_65], %134 {strides = array<i32>} : memref<1x8xf32, #tpu.memory_space<vmem>>, vector<1x8xf32>,
    } else {
    }
    %c0 = arith.constant 0 : index
    %c0_4 = arith.constant 0 : index
    %c0_5 = arith.constant 0 : index
    %8 = vector.load %arg2[%c0, %c0_4, %c0_5] : memref<1x14x8xf32, #tpu.memory_space<vmem>>, vector<1x14x8xf32>
    %9 = vector.shape_cast %8 : vector<1x14x8xf32> to vector<14x8xf32>
    %c0_6 = arith.constant 0 : index
    %c0_7 = arith.constant 0 : index
    %c0_8 = arith.constant 0 : index
    %10 = vector.load %arg3[%c0_6, %c0_7, %c0_8] : memref<1x14x8xf32, #tpu.memory_space<vmem>>, vector<1x14x8xf32>
    %11 = vector.shape_cast %10 : vector<1x14x8xf32> to vector<14x8xf32>
    %12 = vector.extract_strided_slice %9 {offsets = [0, 0], sizes = [9, 8], strides = [1, 1]} : vector<14x8xf32> to vector<9x8xf32>
    %13 = vector.extract_strided_slice %9 {offsets = [9, 0], sizes = [1, 8], strides = [1, 1]} : vector<14x8xf32> to vector<1x8xf32>
    %14 = vector.extract_strided_slice %9 {offsets = [10, 0], sizes = [1, 8], strides = [1, 1]} : vector<14x8xf32> to vector<1x8xf32>
    %15 = vector.extract_strided_slice %9 {offsets = [11, 0], sizes = [3, 8], strides = [1, 1]} : vector<14x8xf32> to vector<3x8xf32>
    %16 = vector.extract_strided_slice %11 {offsets = [0, 0], sizes = [9, 8], strides = [1, 1]} : vector<14x8xf32> to vector<9x8xf32>
    %17 = vector.extract_strided_slice %11 {offsets = [9, 0], sizes = [1, 8], strides = [1, 1]} : vector<14x8xf32> to vector<1x8xf32>
    %18 = vector.extract_strided_slice %11 {offsets = [10, 0], sizes = [1, 8], strides = [1, 1]} : vector<14x8xf32> to vector<1x8xf32>
    %19 = vector.extract_strided_slice %11 {offsets = [11, 0], sizes = [3, 8], strides = [1, 1]} : vector<14x8xf32> to vector<3x8xf32>
    %cst = arith.constant dense<0xFF800000> : vector<8xf32>
    %20 = vector.multi_reduction <maximumf>, %12, %cst [0] : vector<9x8xf32> to vector<8xf32>
    %21 = vector.shape_cast %20 : vector<8xf32> to vector<1x8xf32>
    %22 = vector.broadcast %21 : vector<1x8xf32> to vector<9x8xf32>
    %23 = arith.subf %12, %22 : vector<9x8xf32>
    %24 = math.exp %23 : vector<9x8xf32>
    %cst_9 = arith.constant dense<0.000000e+00> : vector<8xf32>
    %25 = vector.multi_reduction <add>, %24, %cst_9 [0] : vector<9x8xf32> to vector<8xf32>
    %26 = vector.shape_cast %25 : vector<8xf32> to vector<1x8xf32>
    %27 = math.log %26 : vector<1x8xf32>
    %28 = vector.broadcast %27 : vector<1x8xf32> to vector<9x8xf32>
    %29 = arith.subf %23, %28 : vector<9x8xf32>
    %cst_10 = arith.constant dense<0.000000e+00> : vector<8xf32>
    %30 = vector.multi_reduction <add>, %12, %cst_10 [0] : vector<9x8xf32> to vector<8xf32>
    %31 = vector.shape_cast %30 : vector<8xf32> to vector<1x8xf32>
    %cst_11 = arith.constant 0.111111112 : f32
    %32 = vector.broadcast %cst_11 : f32 to vector<1x8xf32>
    %33 = arith.mulf %31, %32 : vector<1x8xf32>
    %34 = arith.addf %21, %27 : vector<1x8xf32>
    %35 = arith.subf %34, %33 : vector<1x8xf32>
    %36 = tpu.iota {dimensions = array<i32: 0>} : vector<9x8xi32>
    %cst_12 = arith.constant dense<0xFF800000> : vector<8xf32>
    %37 = vector.multi_reduction <maximumf>, %16, %cst_12 [0] : vector<9x8xf32> to vector<8xf32>
    %38 = vector.shape_cast %37 : vector<8xf32> to vector<1x8xf32>
    %39 = vector.broadcast %38 : vector<1x8xf32> to vector<9x8xf32>
    %40 = arith.cmpf oeq, %16, %39 : vector<9x8xf32>
    %c9_i32 = arith.constant 9 : i32
    %41 = vector.broadcast %c9_i32 : i32 to vector<9x8xi32>
    %42 = arith.select %40, %36, %41 : vector<9x8xi1>, vector<9x8xi32>
    %cst_13 = arith.constant dense<2147483647> : vector<8xi32>
    %43 = vector.multi_reduction <minsi>, %42, %cst_13 [0] : vector<9x8xi32> to vector<8xi32>
    %44 = vector.shape_cast %43 : vector<8xi32> to vector<1x8xi32>
    %45 = vector.broadcast %44 : vector<1x8xi32> to vector<9x8xi32>
    %46 = arith.cmpi eq, %36, %45 : vector<9x8xi32>
    %47 = arith.extui %46 : vector<9x8xi1> to vector<9x8xi32>
    %48 = arith.sitofp %47 : vector<9x8xi32> to vector<9x8xf32>
    %49 = arith.mulf %48, %29 : vector<9x8xf32>
    %cst_14 = arith.constant dense<0.000000e+00> : vector<8xf32>
    %50 = vector.multi_reduction <add>, %49, %cst_14 [0] : vector<9x8xf32> to vector<8xf32>
    %51 = vector.shape_cast %50 : vector<8xf32> to vector<1x8xf32>
    %cst_15 = arith.constant 0.000000e+00 : f32
    %52 = vector.broadcast %cst_15 : f32 to vector<1x8xf32>
    %53 = arith.subf %52, %51 : vector<1x8xf32>
    %cst_16 = arith.constant 8.500000e-01 : f32
    %54 = vector.broadcast %cst_16 : f32 to vector<1x8xf32>
    %55 = arith.mulf %54, %53 : vector<1x8xf32>
    %cst_17 = arith.constant 1.500000e-01 : f32
    %56 = vector.broadcast %cst_17 : f32 to vector<1x8xf32>
    %57 = arith.mulf %56, %35 : vector<1x8xf32>
    %58 = arith.addf %55, %57 : vector<1x8xf32>
    %59 = arith.subf %13, %17 : vector<1x8xf32>
    %60 = arith.mulf %59, %59 : vector<1x8xf32>
    %61 = arith.subf %14, %18 : vector<1x8xf32>
    %62 = arith.mulf %61, %61 : vector<1x8xf32>
    %cst_18 = arith.constant dense<0xFF800000> : vector<8xf32>
    %63 = vector.multi_reduction <maximumf>, %15, %cst_18 [0] : vector<3x8xf32> to vector<8xf32>
    %64 = vector.shape_cast %63 : vector<8xf32> to vector<1x8xf32>
    %65 = vector.broadcast %64 : vector<1x8xf32> to vector<3x8xf32>
    %66 = arith.subf %15, %65 : vector<3x8xf32>
    %67 = math.exp %66 : vector<3x8xf32>
    %cst_19 = arith.constant dense<0.000000e+00> : vector<8xf32>
    %68 = vector.multi_reduction <add>, %67, %cst_19 [0] : vector<3x8xf32> to vector<8xf32>
    %69 = vector.shape_cast %68 : vector<8xf32> to vector<1x8xf32>
    %70 = math.log %69 : vector<1x8xf32>
    %71 = vector.broadcast %70 : vector<1x8xf32> to vector<3x8xf32>
    %72 = arith.subf %66, %71 : vector<3x8xf32>
    %73 = tpu.iota {dimensions = array<i32: 0>} : vector<3x8xi32>
    %cst_20 = arith.constant dense<0xFF800000> : vector<8xf32>
    %74 = vector.multi_reduction <maximumf>, %19, %cst_20 [0] : vector<3x8xf32> to vector<8xf32>
    %75 = vector.shape_cast %74 : vector<8xf32> to vector<1x8xf32>
    %76 = vector.broadcast %75 : vector<1x8xf32> to vector<3x8xf32>
    %77 = arith.cmpf oeq, %19, %76 : vector<3x8xf32>
    %c3_i32 = arith.constant 3 : i32
    %78 = vector.broadcast %c3_i32 : i32 to vector<3x8xi32>
    %79 = arith.select %77, %73, %78 : vector<3x8xi1>, vector<3x8xi32>
    %cst_21 = arith.constant dense<2147483647> : vector<8xi32>
    %80 = vector.multi_reduction <minsi>, %79, %cst_21 [0] : vector<3x8xi32> to vector<8xi32>
    %81 = vector.shape_cast %80 : vector<8xi32> to vector<1x8xi32>
    %82 = vector.broadcast %81 : vector<1x8xi32> to vector<3x8xi32>
    %83 = arith.cmpi eq, %73, %82 : vector<3x8xi32>
    %84 = arith.extui %83 : vector<3x8xi1> to vector<3x8xi32>
    %85 = arith.sitofp %84 : vector<3x8xi32> to vector<3x8xf32>
    %86 = arith.mulf %85, %72 : vector<3x8xf32>
    %cst_22 = arith.constant dense<0.000000e+00> : vector<8xf32>
    %87 = vector.multi_reduction <add>, %86, %cst_22 [0] : vector<3x8xf32> to vector<8xf32>
    %88 = vector.shape_cast %87 : vector<8xf32> to vector<1x8xf32>
    %cst_23 = arith.constant 0.000000e+00 : f32
    %89 = vector.broadcast %cst_23 : f32 to vector<1x8xf32>
    %90 = arith.subf %89, %88 : vector<1x8xf32>
    %91 = vector.extract_strided_slice %85 {offsets = [0, 0], sizes = [1, 8], strides = [1, 1]} : vector<3x8xf32> to vector<1x8xf32>
    %cst_24 = arith.constant 3.510000e-01 : f32
    %92 = vector.broadcast %cst_24 : f32 to vector<1x8xf32>
    %93 = arith.mulf %92, %91 : vector<1x8xf32>
    %94 = vector.extract_strided_slice %85 {offsets = [1, 0], sizes = [1, 8], strides = [1, 1]} : vector<3x8xf32> to vector<1x8xf32>
    %cst_25 = arith.constant 3.210000e-01 : f32
    %95 = vector.broadcast %cst_25 : f32 to vector<1x8xf32>
    %96 = arith.mulf %95, %94 : vector<1x8xf32>
    %97 = arith.addf %93, %96 : vector<1x8xf32>
    %98 = vector.extract_strided_slice %85 {offsets = [2, 0], sizes = [1, 8], strides = [1, 1]} : vector<3x8xf32> to vector<1x8xf32>
    %cst_26 = arith.constant 3.280000e-01 : f32
    %99 = vector.broadcast %cst_26 : f32 to vector<1x8xf32>
    %100 = arith.mulf %99, %98 : vector<1x8xf32>
    %101 = arith.addf %97, %100 : vector<1x8xf32>
    %c0_27 = arith.constant 0 : index
    %c0_28 = arith.constant 0 : index
    %102 = vector.load %arg5[%c0_27, %c0_28] : memref<1x8xf32, #tpu.memory_space<vmem>>, vector<1x8xf32>
    %103 = arith.addf %102, %58 : vector<1x8xf32>
    %c0_29 = arith.constant 0 : index
    %c0_30 = arith.constant 0 : index
    %104 = vector.load %arg5[%c0_29, %c0_30] : memref<1x8xf32, #tpu.memory_space<vmem>>, vector<1x8xf32>
    tpu.vector_store %arg5[%c0_29, %c0_30], %103 {strides = array<i32>} : memref<1x8xf32, #tpu.memory_space<vmem>>, vector<1x8xf32>,
    %c0_31 = arith.constant 0 : index
    %c0_32 = arith.constant 0 : index
    %105 = vector.load %arg6[%c0_31, %c0_32] : memref<1x8xf32, #tpu.memory_space<vmem>>, vector<1x8xf32>
    %106 = arith.addf %105, %60 : vector<1x8xf32>
    %c0_33 = arith.constant 0 : index
    %c0_34 = arith.constant 0 : index
    %107 = vector.load %arg6[%c0_33, %c0_34] : memref<1x8xf32, #tpu.memory_space<vmem>>, vector<1x8xf32>
    tpu.vector_store %arg6[%c0_33, %c0_34], %106 {strides = array<i32>} : memref<1x8xf32, #tpu.memory_space<vmem>>, vector<1x8xf32>,
    %c0_35 = arith.constant 0 : index
    %c0_36 = arith.constant 0 : index
    %108 = vector.load %arg7[%c0_35, %c0_36] : memref<1x8xf32, #tpu.memory_space<vmem>>, vector<1x8xf32>
    %109 = arith.addf %108, %62 : vector<1x8xf32>
    %c0_37 = arith.constant 0 : index
    %c0_38 = arith.constant 0 : index
    %110 = vector.load %arg7[%c0_37, %c0_38] : memref<1x8xf32, #tpu.memory_space<vmem>>, vector<1x8xf32>
    tpu.vector_store %arg7[%c0_37, %c0_38], %109 {strides = array<i32>} : memref<1x8xf32, #tpu.memory_space<vmem>>, vector<1x8xf32>,
    %c0_39 = arith.constant 0 : index
    %c0_40 = arith.constant 0 : index
    %111 = vector.load %arg8[%c0_39, %c0_40] : memref<1x8xf32, #tpu.memory_space<vmem>>, vector<1x8xf32>
    %112 = arith.mulf %101, %90 : vector<1x8xf32>
    %113 = arith.addf %111, %112 : vector<1x8xf32>
    %c0_41 = arith.constant 0 : index
    %c0_42 = arith.constant 0 : index
    %114 = vector.load %arg8[%c0_41, %c0_42] : memref<1x8xf32, #tpu.memory_space<vmem>>, vector<1x8xf32>
    tpu.vector_store %arg8[%c0_41, %c0_42], %113 {strides = array<i32>} : memref<1x8xf32, #tpu.memory_space<vmem>>, vector<1x8xf32>,
    %c0_43 = arith.constant 0 : index
    %c0_44 = arith.constant 0 : index
    %115 = vector.load %arg9[%c0_43, %c0_44] : memref<1x8xf32, #tpu.memory_space<vmem>>, vector<1x8xf32>
    %116 = arith.addf %115, %101 : vector<1x8xf32>
    %c0_45 = arith.constant 0 : index
    %c0_46 = arith.constant 0 : index
    %117 = vector.load %arg9[%c0_45, %c0_46] : memref<1x8xf32, #tpu.memory_space<vmem>>, vector<1x8xf32>
    tpu.vector_store %arg9[%c0_45, %c0_46], %116 {strides = array<i32>} : memref<1x8xf32, #tpu.memory_space<vmem>>, vector<1x8xf32>,
    %c0_i32_47 = arith.constant 0 : i32
    %118 = arith.cmpi eq, %arg1, %c0_i32_47 : i32
    %119 = arith.extui %118 : i1 to i32
    %c0_i32_48 = arith.constant 0 : i32
    %120 = arith.cmpi ne, %119, %c0_i32_48 : i32
    scf.if %120 {
      %c0_51 = arith.constant 0 : index
      %c0_52 = arith.constant 0 : index
      %126 = vector.load %arg5[%c0_51, %c0_52] : memref<1x8xf32, #tpu.memory_space<vmem>>, vector<1x8xf32>
      %cst_53 = arith.constant dense<0.000000e+00> : vector<1xf32>
      %127 = vector.multi_reduction <add>, %126, %cst_53 [1] : vector<1x8xf32> to vector<1xf32>
      %128 = vector.shape_cast %127 : vector<1xf32> to vector<1x1xf32>
      %c0_54 = arith.constant 0 : index
      %c0_55 = arith.constant 0 : index
      %129 = vector.load %arg6[%c0_54, %c0_55] : memref<1x8xf32, #tpu.memory_space<vmem>>, vector<1x8xf32>
      %cst_56 = arith.constant dense<0.000000e+00> : vector<1xf32>
      %130 = vector.multi_reduction <add>, %129, %cst_56 [1] : vector<1x8xf32> to vector<1xf32>
      %131 = vector.shape_cast %130 : vector<1xf32> to vector<1x1xf32>
      %c0_57 = arith.constant 0 : index
      %c0_58 = arith.constant 0 : index
      %132 = vector.load %arg7[%c0_57, %c0_58] : memref<1x8xf32, #tpu.memory_space<vmem>>, vector<1x8xf32>
      %cst_59 = arith.constant dense<0.000000e+00> : vector<1xf32>
      %133 = vector.multi_reduction <add>, %132, %cst_59 [1] : vector<1x8xf32> to vector<1xf32>
      %134 = vector.shape_cast %133 : vector<1xf32> to vector<1x1xf32>
      %c0_60 = arith.constant 0 : index
      %c0_61 = arith.constant 0 : index
      %135 = vector.load %arg8[%c0_60, %c0_61] : memref<1x8xf32, #tpu.memory_space<vmem>>, vector<1x8xf32>
      %cst_62 = arith.constant dense<0.000000e+00> : vector<1xf32>
      %136 = vector.multi_reduction <add>, %135, %cst_62 [1] : vector<1x8xf32> to vector<1xf32>
      %137 = vector.shape_cast %136 : vector<1xf32> to vector<1x1xf32>
      %c0_63 = arith.constant 0 : index
      %c0_64 = arith.constant 0 : index
      %138 = vector.load %arg9[%c0_63, %c0_64] : memref<1x8xf32, #tpu.memory_space<vmem>>, vector<1x8xf32>
      %cst_65 = arith.constant dense<0.000000e+00> : vector<1xf32>
      %139 = vector.multi_reduction <add>, %138, %cst_65 [1] : vector<1x8xf32> to vector<1xf32>
      %140 = vector.shape_cast %139 : vector<1xf32> to vector<1x1xf32>
      %cst_66 = arith.constant 1.250000e-01 : f32
      %141 = vector.broadcast %cst_66 : f32 to vector<1x1xf32>
      %142 = arith.mulf %128, %141 : vector<1x1xf32>
      %cst_67 = arith.constant 1.250000e-01 : f32
      %143 = vector.broadcast %cst_67 : f32 to vector<1x1xf32>
      %144 = arith.mulf %131, %143 : vector<1x1xf32>
      %145 = math.sqrt %144 : vector<1x1xf32>
      %146 = arith.addf %142, %145 : vector<1x1xf32>
      %cst_68 = arith.constant 1.250000e-01 : f32
      %147 = vector.broadcast %cst_68 : f32 to vector<1x1xf32>
      %148 = arith.mulf %134, %147 : vector<1x1xf32>
      %149 = math.sqrt %148 : vector<1x1xf32>
      %150 = arith.addf %146, %149 : vector<1x1xf32>
      %151 = arith.divf %137, %140 : vector<1x1xf32>
      %152 = arith.addf %150, %151 : vector<1x1xf32>
      %c0_69 = arith.constant 0 : index
      %c0_70 = arith.constant 0 : index
      %153 = vector.load %arg10[%c0_69, %c0_70] : memref<1x1xf32, #tpu.memory_space<vmem>>, vector<1x1xf32>
      %154 = arith.addf %153, %152 : vector<1x1xf32>
      %c0_71 = arith.constant 0 : index
      %c0_72 = arith.constant 0 : index
      %155 = vector.load %arg10[%c0_71, %c0_72] : memref<1x1xf32, #tpu.memory_space<vmem>>, vector<1x1xf32>
      tpu.vector_store %arg10[%c0_71, %c0_72], %154 {strides = array<i32>} : memref<1x1xf32, #tpu.memory_space<vmem>>, vector<1x1xf32>,
    } else {
    }
    %c1_i32 = arith.constant 1 : i32
    %121 = arith.cmpi eq, %arg0, %c1_i32 : i32
    %c0_i32_49 = arith.constant 0 : i32
    %122 = arith.cmpi eq, %arg1, %c0_i32_49 : i32
    %123 = arith.andi %121, %122 : i1
    %124 = arith.extui %123 : i1 to i32
    %c0_i32_50 = arith.constant 0 : i32
    %125 = arith.cmpi ne, %124, %c0_i32_50 : i32
    scf.if %125 {
      %c0_51 = arith.constant 0 : index
      %c0_52 = arith.constant 0 : index
      %126 = vector.load %arg10[%c0_51, %c0_52] : memref<1x1xf32, #tpu.memory_space<vmem>>, vector<1x1xf32>
      %cst_53 = arith.constant 1.250000e-01 : f32
      %127 = vector.broadcast %cst_53 : f32 to vector<1x1xf32>
      %128 = arith.mulf %126, %127 : vector<1x1xf32>
      %c0_54 = arith.constant 0 : index
      %c0_55 = arith.constant 0 : index
      %129 = vector.load %arg4[%c0_54, %c0_55] : memref<1x1xf32, #tpu.memory_space<vmem>>, vector<1x1xf32>
      tpu.vector_store %arg4[%c0_54, %c0_55], %128 {strides = array<i32>} : memref<1x1xf32, #tpu.memory_space<vmem>>, vector<1x1xf32>,
    } else {
    }
    return
  }
  func.func @transform_0(%arg0: i32, %arg1: i32) -> (i32, i32, i32) {
    %c0_i32 = arith.constant 0 : i32
    %c0_i32_0 = arith.constant 0 : i32
    return %arg0, %c0_i32, %arg1 : i32, i32, i32
  }
  func.func @transform_1(%arg0: i32, %arg1: i32) -> (i32, i32, i32) {
    %c0_i32 = arith.constant 0 : i32
    %c0_i32_0 = arith.constant 0 : i32
    return %arg0, %c0_i32, %arg1 : i32, i32, i32
  }
  func.func @transform_2(%arg0: i32, %arg1: i32) -> (i32, i32) {
    %c0_i32 = arith.constant 0 : i32
    %c0_i32_0 = arith.constant 0 : i32
    %c0_i32_1 = arith.constant 0 : i32
    return %c0_i32, %c0_i32_0 : i32, i32
  }
}

</mosaic_0001>

<llo_original>
// kernel: tpu_custom_call.1
$region0: #{tpu_custom_call.1}
  #allocation0 [shape = 'u32[]', space=smem, size = 0x4, offset = 0x4, fixed_abs, tag = 'smem constant byte address 0x4 - core index']
  #allocation1 [shape = 'u32[72,128]{1,0:T(1,128)}', space=vmem, size = 0x9000, scoped, tag = 'internal scratch']
  #allocation2 [shape = 'f32[1,8]{1,0:T(1,128)}', space=vmem, size = 0x200, scoped, tag = 'scratch operand']
  #allocation3 [shape = 'f32[1,8]{1,0:T(1,128)}', space=vmem, size = 0x200, scoped, tag = 'scratch operand']
  #allocation4 [shape = 'f32[1,8]{1,0:T(1,128)}', space=vmem, size = 0x200, scoped, tag = 'scratch operand']
  #allocation5 [shape = 'f32[1,8]{1,0:T(1,128)}', space=vmem, size = 0x200, scoped, tag = 'scratch operand']
  #allocation6 [shape = 'f32[1,8]{1,0:T(1,128)}', space=vmem, size = 0x200, scoped, tag = 'scratch operand']
  #allocation7 [shape = 'f32[1,1]{1,0:T(1,128)}', space=vmem, size = 0x200, scoped, tag = 'scratch operand']
  %s0 = inlined_call_operand.vmem [shape: f32[2,14,8], index: 0, kind: input, shape index: {}]
  %s1 = inlined_call_operand.vmem [shape: f32[2,14,8], index: 1, kind: input, shape index: {}]
  %s2 = inlined_call_operand.hbm [shape: f32[1,1], index: 2, kind: output, shape index: {}]
  %s3 = sld [smem:[#allocation0]]
  $region57: #{tpu_custom_call.1} parent=0
    _
  %s5 = ssub.s32 1, %s3
  %s6 = scalar_select 0, %s5, %s3
  $region1: #{tpu_custom_call.1} parent=0
    #allocation8 [shape = 'u8[512]{0}', space=vmem, size = 0x400, scoped, tag = 'output window, operand 0, single buffered']
    #allocation9 [shape = 's32[2]{0}', space=sflag, size = 0x8, scoped, tag = 'scoped memory for tpu_custom_call.1']
    %7 = vsyncpa [#allocation9], 0
    loop: start=0, step=1, limit=4
    $region2: #{tpu_custom_call.1} parent=1 // loop_pre_header
      _
    $region3: #{tpu_custom_call.1} parent=1 // loop_header
      %s9 = sphi 0, %s13
      %p10 = scmp.ge.s32.totalorder %s9, 4
      %s16 = sphi 0, %s28
      %s17 = sphi 0, %s24
      %s18 = sphi 0, %s16
      %s19 = sphi 0, %s17
      %s20 = sphi 0, %s18
      %s21 = sphi 0, %s19
      %s33 = sphi 0, %s35
      %s36 = sphi 0, %s33
      %s37 = sphi 0, %s36
      %s53 = sphi 0, %s37
      %s61 = sphi 0, %s63
      %s64 = sphi 0, %s61
      %s65 = sphi 0, %s64
      %s81 = sphi 0, %s65
      %s85 = sphi 0, %s85
      %s87 = sphi 0, %s85
      %s88 = sphi 0, %s87
      %s102 = sphi 0, %s88
    $region4: #{tpu_custom_call.1} parent=1 // loop_header_branch
      %12 = sbr.rel (%p10) target = $region8
    $region5: #{tpu_custom_call.1} parent=1 // loop_body
      %s14 = ssub.s32 %s9, 1
      %s15 = ssub.s32 %s9, 2
      %s22 = sadd.s32 1, %s17
      %p23 = scmp.ge.s32.totalorder %s22, 1
      %s24 = scalar_select %p23, 0, %s22
      %s25 = sadd.s32 1, %s16
      %s26 = scalar_select %p23, %s25, %s16
      %p27 = scmp.ge.s32.totalorder %s26, 2
      %s28 = scalar_select %p27, 0, %s26
      %s29 = ssub.s32 %s16, %s28
      %s30 = ssub.s32 %s17, %s24
      %s31 = sor.u32 %s29, %s30
      %p32 = scmp.eq.s32.totalorder %s31, 0
      %s34 = sadd.s32 %s33, 1
      %s35 = scalar_select %p32, %s33, %s34
      %p38 = pneg %p32
      %p39 = scmp.eq.s32.totalorder %s9, 1
      %p40 = por %p38, %p39
      %p41 = scmp.ne.s32.totalorder %s33, %s36
      %p42 = scmp.eq.s32.totalorder %s9, 0
      %p43 = por %p41, %p42
      %p44 = scmp.ne.s32.totalorder %s33, %s36
      %p45 = scmp.eq.s32.totalorder %s14, 1
      %p46 = por %p44, %p45
      %p47 = scmp.ne.s32.totalorder %s36, %s37
      %p48 = scmp.eq.s32.totalorder %s14, 0
      %p49 = por %p47, %p48
      %p50 = scmp.ne.s32.totalorder %s36, %s37
      %p51 = scmp.eq.s32.totalorder %s15, 1
      %p52 = por %p50, %p51
      %p54 = scmp.ne.s32.totalorder %s37, %s53
      %p55 = scmp.eq.s32.totalorder %s15, 0
      %p56 = por %p54, %p55
      %s57 = ssub.s32 %s16, %s28
      %s58 = ssub.s32 %s17, %s24
      %s59 = sor.u32 %s57, %s58
      %p60 = scmp.eq.s32.totalorder %s59, 0
      %s62 = sadd.s32 %s61, 1
      %s63 = scalar_select %p60, %s61, %s62
      %p66 = pneg %p60
      %p67 = scmp.eq.s32.totalorder %s9, 1
      %p68 = por %p66, %p67
      %p69 = scmp.ne.s32.totalorder %s61, %s64
      %p70 = scmp.eq.s32.totalorder %s9, 0
      %p71 = por %p69, %p70
      %p72 = scmp.ne.s32.totalorder %s61, %s64
      %p73 = scmp.eq.s32.totalorder %s14, 1
      %p74 = por %p72, %p73
      %p75 = scmp.ne.s32.totalorder %s64, %s65
      %p76 = scmp.eq.s32.totalorder %s14, 0
      %p77 = por %p75, %p76
      %p78 = scmp.ne.s32.totalorder %s64, %s65
      %p79 = scmp.eq.s32.totalorder %s15, 1
      %p80 = por %p78, %p79
      %p82 = scmp.ne.s32.totalorder %s65, %s81
      %p83 = scmp.eq.s32.totalorder %s15, 0
      %p84 = por %p82, %p83
      %s86 = sadd.s32 %s85, 1
      %p89 = scmp.eq.s32.totalorder %s9, 1
      %p90 = scmp.ne.s32.totalorder %s85, %s87
      %p91 = scmp.eq.s32.totalorder %s9, 0
      %p92 = por %p90, %p91
      %p93 = scmp.ne.s32.totalorder %s85, %s87
      %p94 = scmp.eq.s32.totalorder %s14, 1
      %p95 = por %p93, %p94
      %p96 = scmp.ne.s32.totalorder %s87, %s88
      %p97 = scmp.eq.s32.totalorder %s14, 0
      %p98 = por %p96, %p97
      %p99 = scmp.ne.s32.totalorder %s87, %s88
      %p100 = scmp.eq.s32.totalorder %s15, 1
      %p101 = por %p99, %p100
      %p103 = scmp.ne.s32.totalorder %s88, %s102
      %p104 = scmp.eq.s32.totalorder %s15, 0
      %p105 = por %p103, %p104
      %p106 = scmp.le.s32.totalorder 1, %s9
      %p107 = scmp.lt.s32.totalorder %s9, 3
      %p108 = pnand %p106, %p107
      %p109 = pneg %p108
      // Predicated region
      $region9: #{tpu_custom_call.1} parent=5 // pred_check
        _
      $region10: #{tpu_custom_call.1} parent=5 // pred_check_branch
        %111 = sbr.rel (%p108) target = $region12
      $region11: #{tpu_custom_call.1} parent=5 // pred_region
        %s112 = ssub.s32 %s9, 1
      $region12: #{tpu_custom_call.1} parent=5 // pred_fallthru
        _
      %p113 = scmp.lt.s32.totalorder %s9, 2
      // Predicated region
      $region13: #{tpu_custom_call.1} parent=5 // pred_check
        %p114 = pneg %p113
      $region14: #{tpu_custom_call.1} parent=5 // pred_check_branch
        %116 = sbr.rel (%p114) target = $region16
      $region15: #{tpu_custom_call.1} parent=5 // pred_region
        // Predicated region
        $region17: #{tpu_custom_call.1} parent=15 // pred_check
          %p117 = pneg %p43
        $region18: #{tpu_custom_call.1} parent=15 // pred_check_branch
          %119 = sbr.rel (%p117) target = $region20
        $region19: #{tpu_custom_call.1} parent=15 // pred_region
          %p120 = scmp.lt.s32.totalorder %s16, 1
          %s121 = scalar_select %p120, %s16, 1
          %p122 = scmp.lt.s32.totalorder %s17, 0
          %s123 = scalar_select %p122, %s17, 0
          %s124 = smul.addr %s121, 2
          %s125 = sadd.s32 %s123, %s124
          %s126 = smul.addr %s125, 8
          %s127 = scalar_lea.vmem %s0, %s126
        $region20: #{tpu_custom_call.1} parent=15 // pred_fallthru
          _
        // Predicated region
        $region21: #{tpu_custom_call.1} parent=15 // pred_check
          %p128 = pneg %p71
        $region22: #{tpu_custom_call.1} parent=15 // pred_check_branch
          %130 = sbr.rel (%p128) target = $region24
        $region23: #{tpu_custom_call.1} parent=15 // pred_region
          %p131 = scmp.lt.s32.totalorder %s16, 1
          %s132 = scalar_select %p131, %s16, 1
          %p133 = scmp.lt.s32.totalorder %s17, 0
          %s134 = scalar_select %p133, %s17, 0
          %s135 = smul.addr %s132, 2
          %s136 = sadd.s32 %s134, %s135
          %s137 = smul.addr %s136, 8
          %s138 = scalar_lea.vmem %s1, %s137
        $region24: #{tpu_custom_call.1} parent=15 // pred_fallthru
          _
      $region16: #{tpu_custom_call.1} parent=5 // pred_fallthru
        _
      %p139 = scmp.le.s32.totalorder 1, %s9
      %p140 = scmp.lt.s32.totalorder %s9, 3
      %p141 = pnand %p139, %p140
      %p142 = pneg %p141
      // Predicated region
      $region25: #{tpu_custom_call.1} parent=5 // pred_check
        _
      $region26: #{tpu_custom_call.1} parent=5 // pred_check_branch
        %144 = sbr.rel (%p141) target = $region28
      $region27: #{tpu_custom_call.1} parent=5 // pred_region
        %s145 = ssub.s32 %s9, 1
        %p146 = scmp.lt.s32.totalorder %s18, 1
        %s147 = scalar_select %p146, %s18, 1
        %p148 = scmp.lt.s32.totalorder %s19, 0
        %s149 = scalar_select %p148, %s19, 0
        %s150 = smul.addr %s147, 2
        %s151 = sadd.s32 %s149, %s150
        %s152 = smul.addr %s151, 8
        %s153 = scalar_lea.vmem %s0, %s152
        %p154 = pneg %p49
        %p155 = pneg %p46
        %p156 = scmp.lt.s32.totalorder %s18, 1
        %s157 = scalar_select %p156, %s18, 1
        %p158 = scmp.lt.s32.totalorder %s19, 0
        %s159 = scalar_select %p158, %s19, 0
        %s160 = smul.addr %s157, 2
        %s161 = sadd.s32 %s159, %s160
        %s162 = smul.addr %s161, 8
        %s163 = scalar_lea.vmem %s1, %s162
        %p164 = pneg %p77
        %p165 = pneg %p74
        %p166 = pneg %p98
        %p167 = pneg %p95
        %p168 = scmp.lt.s32.totalorder %s18, 1
        %s169 = scalar_select %p168, %s18, 1
        %p170 = scmp.lt.s32.totalorder %s19, 0
        %s171 = scalar_select %p170, %s19, 0
        %s172 = smul.addr %s169, 2
        %s173 = sadd.s32 %s171, %s172
        %s174 = smul.addr %s173, 8
        %s175 = scalar_lea.vmem %s0, %s174
        %p176 = scmp.lt.s32.totalorder %s18, 1
        %s177 = scalar_select %p176, %s18, 1
        %p178 = scmp.lt.s32.totalorder %s19, 0
        %s179 = scalar_select %p178, %s19, 0
        %s180 = smul.addr %s177, 2
        %s181 = sadd.s32 %s179, %s180
        %s182 = smul.addr %s181, 8
        %s183 = scalar_lea.vmem %s1, %s182
        %p184 = scmp.eq.s32.totalorder %s18, 0
        %p185 = scmp.eq.s32.totalorder %s19, 0
        %p186 = pnand %p184, %p185
        %p187 = pneg %p186
        // Predicated region
        $region29: #{tpu_custom_call.1} parent=27 // pred_check
          _
        $region30: #{tpu_custom_call.1} parent=27 // pred_check_branch
          %189 = sbr.rel (%p186) target = $region32
        $region31: #{tpu_custom_call.1} parent=27 // pred_region
          %vm190 = vcmask 0
          %191 = vst.msk [vmem:[#allocation7] sm:$0x1] %vm190, 0.0
        $region32: #{tpu_custom_call.1} parent=27 // pred_fallthru
          _
        // Predicated region
        $region33: #{tpu_custom_call.1} parent=27 // pred_check
          %p192 = pneg %p185
        $region34: #{tpu_custom_call.1} parent=27 // pred_check_branch
          %194 = sbr.rel (%p192) target = $region36
        $region35: #{tpu_custom_call.1} parent=27 // pred_region
          %vm195 = vcmask 57344
          %196 = vst.msk [vmem:[#allocation2] sm:$0x1] %vm195, 0.0
          %197 = vst.msk [vmem:[#allocation3] sm:$0x1] %vm195, 0.0
          %198 = vst.msk [vmem:[#allocation4] sm:$0x1] %vm195, 0.0
          %199 = vst.msk [vmem:[#allocation5] sm:$0x1] %vm195, 0.0
          %200 = vst.msk [vmem:[#allocation6] sm:$0x1] %vm195, 0.0
        $region36: #{tpu_custom_call.1} parent=27 // pred_fallthru
          _
        %v201 = vld [vmem:[%s175] sm:$0xff]
        %v202 = vld [vmem:[%s175 + $0x8] sm:$0x3f]
        %v203 = vld [vmem:[%s183] sm:$0xff]
        %v204 = vld [vmem:[%s183 + $0x8] sm:$0x3f]
        %vm205 = vcmask 64512
        %v206 = vsel %vm205, %v201, -inf
        %vm207 = vcmask 57344
        %v208 = vsel %vm207, %v202, -inf
        %v209 = vmax.f32 %v206, %v208
        %v210 = vrot.slane %v209, 4
        %v211 = vmax.f32 %v209, %v210
        %v212 = vrot.slane %v211, 2
        %v213 = vmax.f32 %v211, %v212
        %v214 = vrot.slane %v213, 1
        %v215 = vmax.f32 %v213, %v214
        %v216 = vsub.f32 %v201, %v215
        %v217 = vsub.f32 %v202, %v215
        %v218 = vmul.f32 %v216, 1.442695
        %v219 = vpow.pop %v218
        %v220 = vmul.f32 %v217, 1.442695
        %v221 = vpow.pop %v220
        %v222 = vsel %vm205, %v219, 0.0
        %v223 = vsel %vm207, %v221, 0.0
        %v224 = vadd.f32 %v222, %v223
        %v225 = vrot.slane %v224, 4
        %v226 = vadd.f32 %v224, %v225
        %v227 = vrot.slane %v226, 2
        %v228 = vadd.f32 %v226, %v227
        %v229 = vrot.slane %v228, 1
        %v230 = vadd.f32 %v228, %v229
        %v231 = vlog2.pop %v230
        %v232 = vmul.f32 %v231, 0.6931472
        %v233 = vsub.f32 %v216, %v232
        %v234 = vsub.f32 %v217, %v232
        %v235 = vsel %vm205, %v201, 0.0
        %v236 = vsel %vm207, %v202, 0.0
        %v237 = vadd.f32 %v235, %v236
        %v238 = vrot.slane %v237, 4
        %v239 = vadd.f32 %v237, %v238
        %v240 = vrot.slane %v239, 2
        %v241 = vadd.f32 %v239, %v240
        %v242 = vrot.slane %v241, 1
        %v243 = vadd.f32 %v241, %v242
        %v244 = vmul.f32 %v243, 0.11111111
        %v245 = vadd.f32 %v215, %v232
        %v246 = vsub.f32 %v245, %v244
        %v247 = vlaneseq
        %v248 = vshrl.u32 %v247, 7
        %v249 = vadd.s32 %v248, 8
        %v250 = vsel %vm205, %v203, -inf
        %v251 = vsel %vm207, %v204, -inf
        %v252 = vmax.f32 %v250, %v251
        %v253 = vrot.slane %v252, 4
        %v254 = vmax.f32 %v252, %v253
        %v255 = vrot.slane %v254, 2
        %v256 = vmax.f32 %v254, %v255
        %v257 = vrot.slane %v256, 1
        %v258 = vmax.f32 %v256, %v257
        %vm259 = vcmp.eq.f32.partialorder %v203, %v258
        %vm260 = vcmp.eq.f32.partialorder %v204, %v258
        %v261 = vsel %vm259, %v248, 9
        %v262 = vsel %vm260, %v249, 9
        %v263 = vsel %vm205, %v261, 2147483647
        %v264 = vsel %vm207, %v262, 2147483647
        %vm265 = vcmp.lt.s32.totalorder %v263, %v264
        %v266 = vsel %vm265, %v263, %v264
        %v267 = vrot.slane %v266, 4
        %vm268 = vcmp.lt.s32.totalorder %v266, %v267
        %v269 = vsel %vm268, %v266, %v267
        %v270 = vrot.slane %v269, 2
        %vm271 = vcmp.lt.s32.totalorder %v269, %v270
        %v272 = vsel %vm271, %v269, %v270
        %v273 = vrot.slane %v272, 1
        %vm274 = vcmp.lt.s32.totalorder %v272, %v273
        %v275 = vsel %vm274, %v272, %v273
        %vm276 = vcmp.eq.s32.totalorder %v248, %v275
        %vm277 = vcmp.eq.s32.totalorder %v249, %v275
        %v278 = vsel %vm276, 1, 0
        %v279 = vsel %vm277, 1, 0
        %v280 = vcvt.s32.f32 %v278
        %v281 = vcvt.s32.f32 %v279
        %v282 = vmul.f32 %v280, %v233
        %v283 = vmul.f32 %v281, %v234
        %v284 = vsel %vm205, %v282, 0.0
        %v285 = vsel %vm207, %v283, 0.0
        %v286 = vadd.f32 %v284, %v285
        %v287 = vrot.slane %v286, 4
        %v288 = vadd.f32 %v286, %v287
        %v289 = vrot.slane %v288, 2
        %v290 = vadd.f32 %v288, %v289
        %v291 = vrot.slane %v290, 1
        %v292 = vadd.f32 %v290, %v291
        %v293 = vsub.f32 0.0, %v292
        %v294 = vmul.f32 %v293, 0.85
        %v295 = vmul.f32 %v246, 0.15
        %v296 = vadd.f32 %v294, %v295
        %v297 = vsub.f32 %v202, %v204
        %v298 = vmul.f32 %v297, %v297
        %vm299 = vcmask 62467
        %v300 = vsel %vm299, %v202, -inf
        %v301 = vrot.slane %v300, 4
        %v302 = vmax.f32 %v300, %v301
        %v303 = vrot.slane %v302, 2
        %v304 = vmax.f32 %v302, %v303
        %v305 = vrot.slane %v304, 1
        %v306 = vmax.f32 %v304, %v305
        %v307 = vsub.f32 %v202, %v306
        %v308 = vmul.f32 %v307, 1.442695
        %v309 = vpow.pop %v308
        %v311 = vrot.slane %v309, 3
        %vm313 = vcmask 59392
        %v314 = vsel %vm313, %v311, 0.0
        %v315 = vrot.slane %v314, 4
        %v316 = vadd.f32 %v314, %v315
        %v317 = vrot.slane %v316, 2
        %v318 = vadd.f32 %v316, %v317
        %v319 = vrot.slane %v318, 1
        %v320 = vadd.f32 %v318, %v319
        %v321 = vlog2.pop %v320
        %v322 = vmul.f32 %v321, 0.6931472
        %v323 = vsub.f32 %v307, %v322
        %v324 = vsel %vm299, %v204, -inf
        %v325 = vrot.slane %v324, 4
        %v326 = vmax.f32 %v324, %v325
        %v327 = vrot.slane %v326, 2
        %v328 = vmax.f32 %v326, %v327
        %v329 = vrot.slane %v328, 1
        %v330 = vmax.f32 %v328, %v329
        %vm331 = vcmp.eq.f32.partialorder %v204, %v330
        %v332 = vrot.slane %v248, 5
        %v333 = vsel %vm331, %v332, 3
        %v334 = vsel %vm299, %v333, 2147483647
        %v335 = vrot.slane %v334, 4
        %vm336 = vcmp.lt.s32.totalorder %v334, %v335
        %v337 = vsel %vm336, %v334, %v335
        %v338 = vrot.slane %v337, 2
        %vm339 = vcmp.lt.s32.totalorder %v337, %v338
        %v340 = vsel %vm339, %v337, %v338
        %v341 = vrot.slane %v340, 1
        %vm342 = vcmp.lt.s32.totalorder %v340, %v341
        %v343 = vsel %vm342, %v340, %v341
        %vm344 = vcmp.eq.s32.totalorder %v248, %v343
        %v345 = vsel %vm344, 1, 0
        %v346 = vcvt.s32.f32 %v345
        %v348 = vrot.slane %v323, 3
        %v350 = vmul.f32 %v346, %v348
        %v351 = vsel %vm313, %v350, 0.0
        %v352 = vrot.slane %v351, 4
        %v353 = vadd.f32 %v351, %v352
        %v354 = vrot.slane %v353, 2
        %v355 = vadd.f32 %v353, %v354
        %v356 = vrot.slane %v355, 1
        %v357 = vadd.f32 %v355, %v356
        %v358 = vsub.f32 0.0, %v357
        %v359 = vmul.f32 %v346, 0.351
        %v360 = vmul.f32 %v346, 0.321
        %v362 = vrot.slane %v360, 1
        %v364 = vadd.f32 %v359, %v362
        %v365 = vmul.f32 %v346, 0.328
        %v367 = vrot.slane %v365, 2
        %v369 = vadd.f32 %v364, %v367
        %v370 = vld [vmem:[#allocation2] sm:$0x1]
        %v371 = vadd.f32 %v370, %v296
        %372 = vst.msk [vmem:[#allocation2] sm:$0x1] %vm207, %v371
        %v373 = vld [vmem:[#allocation3] sm:$0x1]
        %375 = vst [vmem:[#allocation1] sm:$0xff] %v298
        %s376 = scalar_lea.vmem [#allocation1], 1
        %v377 = vld [vmem:[%s376] ss:$9 sm:$0xff]
        %v379 = vadd.f32 %v373, %v377
        %380 = vst.msk [vmem:[#allocation3] sm:$0x1] %vm207, %v379
        %v381 = vld [vmem:[#allocation4] sm:$0x1]
        %382 = vst [vmem:[#allocation1] sm:$0xff] %v298
        %s383 = scalar_lea.vmem [#allocation1], 2
        %v384 = vld [vmem:[%s383] ss:$9 sm:$0xff]
        %v386 = vadd.f32 %v381, %v384
        %387 = vst.msk [vmem:[#allocation4] sm:$0x1] %vm207, %v386
        %v388 = vld [vmem:[#allocation5] sm:$0x1]
        %v389 = vmul.f32 %v369, %v358
        %v390 = vadd.f32 %v388, %v389
        %391 = vst.msk [vmem:[#allocation5] sm:$0x1] %vm207, %v390
        %v392 = vld [vmem:[#allocation6] sm:$0x1]
        %v393 = vadd.f32 %v392, %v369
        %394 = vst.msk [vmem:[#allocation6] sm:$0x1] %vm207, %v393
        // Predicated region
        $region37: #{tpu_custom_call.1} parent=27 // pred_check
          %p395 = pneg %p185
        $region38: #{tpu_custom_call.1} parent=27 // pred_check_branch
          %397 = sbr.rel (%p395) target = $region40
        $region39: #{tpu_custom_call.1} parent=27 // pred_region
          %v398 = vld [vmem:[#allocation2] sm:$0x1]
          %v399 = vsel %vm207, %v398, 0.0
          %400 = vadd.xlane.f32.xlu0 %v399
          %v401 = vpop.xlane.xlu0 %400
          %v402 = vld [vmem:[#allocation3] sm:$0x1]
          %v403 = vsel %vm207, %v402, 0.0
          %404 = vadd.xlane.f32.xlu0 %v403
          %v405 = vpop.xlane.xlu0 %404
          %v406 = vld [vmem:[#allocation4] sm:$0x1]
          %v407 = vsel %vm207, %v406, 0.0
          %408 = vadd.xlane.f32.xlu0 %v407
          %v409 = vpop.xlane.xlu0 %408
          %v410 = vld [vmem:[#allocation5] sm:$0x1]
          %v411 = vsel %vm207, %v410, 0.0
          %412 = vadd.xlane.f32.xlu0 %v411
          %v413 = vpop.xlane.xlu0 %412
          %v414 = vld [vmem:[#allocation6] sm:$0x1]
          %v415 = vsel %vm207, %v414, 0.0
          %416 = vadd.xlane.f32.xlu0 %v415
          %v417 = vpop.xlane.xlu0 %416
          %v418 = vmul.f32 %v401, 0.125
          %v419 = vmul.f32 %v405, 0.125
          %v420 = vrsqrt.pop %v419
          %v421 = vmul.f32 %v420, %v419
          %v422 = vmul.f32 %v421, %v420
          %v423 = vmul.f32 0.5, %v422
          %v424 = vsub.f32 1.5, %v423
          %v425 = vmul.f32 %v420, %v424
          %v426 = vmul.f32 %v419, %v425
          %vm427 = vcmp.eq.f32.partialorder %v419, inf
          %v428 = vsel %vm427, %v419, %v426
          %vm429 = vcmp.eq.f32.partialorder %v419, 0.0
          %v430 = vand.u32 %v419, 2147483648
          %v431 = vsel %vm429, %v430, %v428
          %v432 = vadd.f32 %v418, %v431
          %v433 = vmul.f32 %v409, 0.125
          %v434 = vrsqrt.pop %v433
          %v435 = vmul.f32 %v434, %v433
          %v436 = vmul.f32 %v435, %v434
          %v437 = vmul.f32 0.5, %v436
          %v438 = vsub.f32 1.5, %v437
          %v439 = vmul.f32 %v434, %v438
          %v440 = vmul.f32 %v433, %v439
          %vm441 = vcmp.eq.f32.partialorder %v433, inf
          %v442 = vsel %vm441, %v433, %v440
          %vm443 = vcmp.eq.f32.partialorder %v433, 0.0
          %v444 = vand.u32 %v433, 2147483648
          %v445 = vsel %vm443, %v444, %v442
          %v446 = vadd.f32 %v432, %v445
          %v447 = vrcp.pop %v417
          %v448 = vmul.f32 %v417, %v447
          %v449 = vsub.f32 1.0, %v448
          %v450 = vmul.f32 %v447, %v449
          %v451 = vadd.f32 %v447, %v450
          %vm452 = vweird.f32 %v417
          %vm453 = vweird.f32 %v447
          %vm454 = vmor %vm452, %vm453
          %v455 = vsel %vm454, %v447, %v451
          %v456 = vand.u32 2147483647, %v417
          %vm457 = vcmp.eq.f32.partialorder %v456, 8.507059e+37
          %v458 = vand.u32 %v417, 2147483648
          %v459 = vor.u32 1.1754944e-38, %v458
          %v460 = vsel %vm457, %v459, %v455
          %v461 = vmul.f32 %v413, %v460
          %v462 = vadd.f32 %v446, %v461
          %v463 = vld [vmem:[#allocation7] sm:$0x1]
          %v464 = vadd.f32 %v463, %v462
          %vm465 = vcmask 0
          %466 = vst.msk [vmem:[#allocation7] sm:$0x1] %vm465, %v464
        $region40: #{tpu_custom_call.1} parent=27 // pred_fallthru
          _
        %p467 = scmp.eq.s32.totalorder %s18, 1
        %p468 = pnand %p467, %p185
        %p469 = pneg %p468
        // Predicated region
        $region41: #{tpu_custom_call.1} parent=27 // pred_check
          _
        $region42: #{tpu_custom_call.1} parent=27 // pred_check_branch
          %471 = sbr.rel (%p468) target = $region44
        $region43: #{tpu_custom_call.1} parent=27 // pred_region
          %v472 = vld [vmem:[#allocation7] sm:$0x1]
          %v473 = vmul.f32 %v472, 0.125
          %vm474 = vcmask 0
          %475 = vst.msk [vmem:[#allocation8] sm:$0x1] %vm474, %v473
        $region44: #{tpu_custom_call.1} parent=27 // pred_fallthru
          _
        // Predicated region
        $region45: #{tpu_custom_call.1} parent=27 // pred_check
          %p476 = pneg %p95
        $region46: #{tpu_custom_call.1} parent=27 // pred_check_branch
          %478 = sbr.rel (%p476) target = $region48
        $region47: #{tpu_custom_call.1} parent=27 // pred_region
          %480 = vsyncadd [#allocation9], 0
          %s482 = sshll.u32 [#allocation8], 4
          %s483 = int_to_ptr.vmem [resolvable:$true] %s482
          %s484 = sshll.u32 %s2, 4
          %s485 = int_to_ptr.hbm [resolvable:$true] %s484
          %487 = dma.vmem_to_hbm [thread:$0]  %s483, 16, %s485, [#allocation9]
        $region48: #{tpu_custom_call.1} parent=27 // pred_fallthru
          _
        // Predicated region
        $region49: #{tpu_custom_call.1} parent=27 // pred_check
          %p488 = pneg %p95
        $region50: #{tpu_custom_call.1} parent=27 // pred_check_branch
          %490 = sbr.rel (%p488) target = $region52
        $region51: #{tpu_custom_call.1} parent=27 // pred_region
          %492 = dma.done [#allocation9], 16
        $region52: #{tpu_custom_call.1} parent=27 // pred_fallthru
          _
      $region28: #{tpu_custom_call.1} parent=5 // pred_fallthru
        _
      %p493 = scmp.le.s32.totalorder 2, %s9
      // Predicated region
      $region53: #{tpu_custom_call.1} parent=5 // pred_check
        %p494 = pneg %p493
      $region54: #{tpu_custom_call.1} parent=5 // pred_check_branch
        %496 = sbr.rel (%p494) target = $region56
      $region55: #{tpu_custom_call.1} parent=5 // pred_region
        %s497 = ssub.s32 %s9, 2
      $region56: #{tpu_custom_call.1} parent=5 // pred_fallthru
        _
    $region6: #{tpu_custom_call.1} parent=1 // loop_footer
      %s13 = sadd.s32 1, %s9
    $region7: #{tpu_custom_call.1} parent=1 // loop_footer_branch
      %8 = sbr.rel target = $region3
    $region8: #{tpu_custom_call.1} parent=1 // loop_exit
      _
    %498 = vsyncpa [#allocation9], 1
    %s499 = scalar_lea.sflag [#allocation9], 1
    %500 = vsyncpa %s499, 1

</llo_original>
